<compile_context>
chip_gen: v7x
topology: tpu7x:2x2x1
jax: 0.10.0
libtpu: 0.0.40
codegen_flags: <defaults>
</compile_context>

<pallas_src>
import functools
import math

import jax
import jax.numpy as jnp
from jax.experimental import pallas as pl
from jax.experimental.pallas import tpu as pltpu


# Contract the last dim of both operands: A(M,K) x B(N,K) -> (M,N).
_NT_DIMS = (((1,), (1,)), ((), ()))
_LANE = 128


def _group_width(ob_dim, size):
    """Lane width of one packed weight group (128-aligned; last col = bias)."""
    return _LANE * pl.cdiv(max(ob_dim, size) + 1, _LANE)


def _default_compute_dtype():
    """bf16 on v6e/v7x (bf16 EUP/VPU), f32 on v5e and older."""
    try:
        kind = jax.devices()[0].device_kind.lower()
    except Exception:  # pragma: no cover - defensive
        return jnp.float32
    if any(f"v{v}" in kind for v in (2, 3, 4, 5)):
        return jnp.float32
    return jnp.bfloat16


def _mlp_kernel(x_ref, w_ref, o_ref, *, n_hidden, ob_dim, size, G, discrete,
                precision):
    act = (lambda v: jnp.maximum(v, 0.0)) if discrete else jnp.tanh
    cdt = w_ref.dtype                                  # compute dtype (f32/bf16)

    # ---- fc_in on the MXU, x consumed in natural (TM, ob_dim) layout ----------
    # (size, ob_dim) . (TM, ob_dim)^T -> (size, TM); K=ob_dim is padded/masked by
    # the matmul lowering, so no transpose of x is ever materialized.
    w_in = w_ref[:, 0:ob_dim].astype(jnp.float32)      # torch (out, in) layout
    b_in = w_ref[:, G - 1:G].astype(jnp.float32)       # (size, 1)
    z = jax.lax.dot_general(w_in, x_ref[...], _NT_DIMS,
                            preferred_element_type=jnp.float32,
                            precision=precision) + b_in
    h = act(z.astype(cdt))                             # (size, TM), batch on lanes

    # ---- hidden layers: statically unrolled, 128-aligned static slices --------
    for l in range(n_hidden):
        base = (1 + l) * G
        w = w_ref[:, base:base + size]                 # (size, size), native dtype
        b = w_ref[:, base + G - 1:base + G].astype(jnp.float32)
        z = jnp.dot(w, h, preferred_element_type=jnp.float32,
                    precision=precision) + b
        h = act(z.astype(cdt))

    # ---- fc_out: N = 1 -> VPU multiply + XLU sublane reduce (skip the MXU) ----
    base = (1 + n_hidden) * G
    w_out = w_ref[:, base:base + 1].astype(jnp.float32)            # (size, 1)
    b_out = w_ref[0:1, base + G - 1:base + G].astype(jnp.float32)  # (1, 1)
    o_ref[...] = (jnp.sum(h.astype(jnp.float32) * w_out, axis=0, keepdims=True)
                  + b_out).astype(o_ref.dtype)                     # (1, TM)


def pack_params(params, *, ob_dim, size, G):
    """Pack all weights + biases into a single (size, n_groups*G) array.

    Group g (128-aligned lanes): cols [0:in_g] = layer weights (torch layout),
    last col = bias column.  Final group: col 0 = fc_out weight column,
    element [0, G-1] = fc_out bias scalar.
    """
    n_hidden = params["w_hid"].shape[0]
    n_groups = n_hidden + 2
    W = jnp.zeros((size, n_groups * G), jnp.float32)
    W = W.at[:, :ob_dim].set(params["w_in"])                # (size, ob_dim)
    W = W.at[:, G - 1].set(params["b_in"])                  # (size,)
    for l in range(n_hidden):
        base = (1 + l) * G
        W = W.at[:, base:base + size].set(params["w_hid"][l])
        W = W.at[:, base + G - 1].set(params["b_hid"][l])
    base = (1 + n_hidden) * G
    W = W.at[:, base].set(params["w_out"])                  # (size,)
    W = W.at[0, base + G - 1].set(params["b_out"])          # scalar
    return W


def baseline_forward(x, params, *, discrete, compute_dtype=None):
    """x: (B, ob_dim) float32.  Returns (B, 1) float32 (matches torch module)."""
    B, ob_dim = x.shape
    size = params["w_in"].shape[0]
    n_hidden = int(params["w_hid"].shape[0])
    if compute_dtype is None:
        compute_dtype = _default_compute_dtype()

    G = _group_width(ob_dim, size)
    W = pack_params(params, ob_dim=ob_dim, size=size, G=G).astype(compute_dtype)

    # Explicit matmul precision: bit-close f32 path on v5e/older, cheap bf16
    # single-pass MXU on v6e/v7x (f32 accumulation via preferred_element_type).
    precision = (jax.lax.Precision.HIGHEST if compute_dtype == jnp.float32
                 else jax.lax.Precision.DEFAULT)

    # Batch tile: cap by vreg pressure of the live f32 activation h=(size, TM)
    # (size*TM*4B <= ~128 KiB == half the vreg file), and split into >=2 blocks
    # whenever legal so the 'parallel' axis feeds both v7x TensorCores.
    tm_cap = max(_LANE, ((128 * 1024) // (4 * size)) // _LANE * _LANE)
    if B > _LANE:
        TM = min(tm_cap, _LANE * pl.cdiv(pl.cdiv(B, 2), _LANE))
    else:
        TM = B
    grid_b = pl.cdiv(B, TM)

    kernel = functools.partial(_mlp_kernel, n_hidden=n_hidden, ob_dim=ob_dim,
                               size=size, G=G, discrete=discrete,
                               precision=precision)

    out = pl.pallas_call(
        kernel,
        out_shape=jax.ShapeDtypeStruct((1, B), jnp.float32),
        grid=(grid_b,),
        in_specs=[
            pl.BlockSpec((TM, ob_dim), lambda i: (i, 0)),   # x, natural layout
            pl.BlockSpec(W.shape, lambda i: (0, 0)),        # weights VMEM-resident
        ],
        out_specs=pl.BlockSpec((1, TM), lambda i: (0, i)),  # lane-dense output
        compiler_params=pltpu.CompilerParams(
            dimension_semantics=("parallel",)),
    )(x, W)
    return out.reshape(B, 1)   # (1,B) -> (B,1) is a free, layout-preserving reshape


def init_params(key, ob_dim, size, n_layers):
    """Torch nn.Linear default init (uniform +/- 1/sqrt(fan_in)), torch layouts."""
    assert n_layers > 0
    n_hidden = n_layers - 1
    keys = jax.random.split(key, 2 * (n_layers + 1))

    def unif(k, shape, fan_in):
        bound = 1.0 / math.sqrt(float(fan_in))
        return jax.random.uniform(k, shape, jnp.float32, -bound, bound)

    params = {
        "w_in": unif(keys[0], (size, ob_dim), ob_dim),
        "b_in": unif(keys[1], (size,), ob_dim),
        "w_hid": (jnp.stack([unif(keys[2 + 2 * l], (size, size), size)
                             for l in range(n_hidden)])
                  if n_hidden > 0 else jnp.zeros((0, size, size), jnp.float32)),
        "b_hid": (jnp.stack([unif(keys[3 + 2 * l], (size,), size)
                             for l in range(n_hidden)])
                  if n_hidden > 0 else jnp.zeros((0, size), jnp.float32)),
        "w_out": unif(keys[2 + 2 * n_hidden], (size,), size),
        "b_out": unif(keys[3 + 2 * n_hidden], (), size),
    }
    return params


def baseline_ref(x, params, *, discrete):
    """Pure-JAX reference (full-precision matmuls) for correctness checks."""
    act = (lambda v: jnp.maximum(v, 0.0)) if discrete else jnp.tanh
    mm = functools.partial(jnp.matmul, precision=jax.lax.Precision.HIGHEST)
    h = act(mm(x, params["w_in"].T) + params["b_in"])
    for l in range(params["w_hid"].shape[0]):
        h = act(mm(h, params["w_hid"][l].T) + params["b_hid"][l])
    return mm(h, params["w_out"][:, None]) + params["b_out"]


if __name__ == "__main__":
    # Small shapes implied by the module: obs vector -> hidden MLP -> scalar value.
    B, OB_DIM, SIZE, N_LAYERS = 8, 4, 32, 2

    key = jax.random.PRNGKey(0)
    kx, kp, kx2 = jax.random.split(key, 3)
    x = jax.random.normal(kx, (B, OB_DIM), jnp.float32)
    params = init_params(kp, OB_DIM, SIZE, N_LAYERS)

    # 1) f32 compute path, tanh (continuous control), single small block.
    out = jax.block_until_ready(
        baseline_forward(x, params, discrete=False, compute_dtype=jnp.float32))
    ref = baseline_ref(x, params, discrete=False)
    assert out.shape == (B, 1)
    assert jnp.allclose(out, ref, atol=1e-5, rtol=1e-5), "mismatch (f32, tanh)"

    # 2) relu / discrete path, f32.
    out_d = jax.block_until_ready(
        baseline_forward(x, params, discrete=True, compute_dtype=jnp.float32))
    ref_d = baseline_ref(x, params, discrete=True)
    assert jnp.allclose(out_d, ref_d, atol=1e-5, rtol=1e-5), "mismatch (f32, relu)"

    # 3) larger batch: tiled grid (>= 2 'parallel' blocks for the v7x 2-TC split)
    #    with the auto-selected compute dtype (bf16 on v6e/v7x, f32 on v5e/older).
    B2 = 1024
    x2 = jax.random.normal(kx2, (B2, OB_DIM), jnp.float32)
    cdt = _default_compute_dtype()
    out2 = jax.block_until_ready(baseline_forward(x2, params, discrete=False))
    ref2 = baseline_ref(x2, params, discrete=False)
    tol = 1e-5 if cdt == jnp.float32 else 6e-2
    assert out2.shape == (B2, 1)
    assert jnp.allclose(out2, ref2, atol=tol, rtol=tol), "mismatch (tiled/auto dtype)"

    print("KERNEL_OK")
</pallas_src>

<mosaic_0001>
module attributes {stable_mosaic.version = 11 : i64} {
  func.func @_mlp_kernel(%arg0: i32, %arg1: memref<8x4xf32, #tpu.memory_space<vmem>>, %arg2: memref<32x384xf32, #tpu.memory_space<vmem>>, %arg3: memref<1x8xf32, #tpu.memory_space<vmem>>) attributes {dimension_semantics = [#tpu.dimension_semantics<parallel>], iteration_bounds = array<i64: 1>, scalar_prefetch = 0 : i64, scratch_operands = 0 : i64, tpu.core_type = #tpu.core_type<tc>, window_params = [{transform_indices = @transform_0, window_bounds = array<i64: 8, 4>}, {pipeline_mode = #tpu.pipeline_mode<synchronous>, transform_indices = @transform_1, window_bounds = array<i64: 32, 384>}, {transform_indices = @transform_2, window_bounds = array<i64: 1, 8>}]} {
    %c0 = arith.constant 0 : index
    %c0_0 = arith.constant 0 : index
    %0 = vector.load %arg2[%c0, %c0_0] : memref<32x384xf32, #tpu.memory_space<vmem>>, vector<32x4xf32>
    %c0_1 = arith.constant 0 : index
    %c127 = arith.constant 127 : index
    %1 = vector.load %arg2[%c0_1, %c127] : memref<32x384xf32, #tpu.memory_space<vmem>>, vector<32x1xf32>
    %c0_2 = arith.constant 0 : index
    %c0_3 = arith.constant 0 : index
    %2 = vector.load %arg1[%c0_2, %c0_3] : memref<8x4xf32, #tpu.memory_space<vmem>>, vector<8x4xf32>
    %cst = arith.constant dense<0.000000e+00> : vector<32x8xf32>
    %3 = tpu.matmul %0, %2, %cst {dimension_numbers = #tpu.dot_dimension_numbers<[1], [1], [0], [0], [0, 0, 1, 0], [], []>, precision = #tpu.contract_precision<fp32>} : vector<32x4xf32>, vector<8x4xf32>, vector<32x8xf32> -> vector<32x8xf32>
    %4 = vector.broadcast %1 : vector<32x1xf32> to vector<32x8xf32>
    %5 = arith.addf %3, %4 : vector<32x8xf32>
    %6 = math.tanh %5 : vector<32x8xf32>
    %c0_4 = arith.constant 0 : index
    %c128 = arith.constant 128 : index
    %7 = vector.load %arg2[%c0_4, %c128] : memref<32x384xf32, #tpu.memory_space<vmem>>, vector<32x32xf32>
    %c0_5 = arith.constant 0 : index
    %c255 = arith.constant 255 : index
    %8 = vector.load %arg2[%c0_5, %c255] : memref<32x384xf32, #tpu.memory_space<vmem>>, vector<32x1xf32>
    %cst_6 = arith.constant dense<0.000000e+00> : vector<32x8xf32>
    %9 = tpu.matmul %7, %6, %cst_6 {dimension_numbers = #tpu.dot_dimension_numbers<[1], [0], [0], [1], [0, 0, 1, 1], [], []>, precision = #tpu.contract_precision<fp32>} : vector<32x32xf32>, vector<32x8xf32>, vector<32x8xf32> -> vector<32x8xf32>
    %10 = vector.broadcast %8 : vector<32x1xf32> to vector<32x8xf32>
    %11 = arith.addf %9, %10 : vector<32x8xf32>
    %12 = math.tanh %11 : vector<32x8xf32>
    %c0_7 = arith.constant 0 : index
    %c256 = arith.constant 256 : index
    %13 = vector.load %arg2[%c0_7, %c256] : memref<32x384xf32, #tpu.memory_space<vmem>>, vector<32x1xf32>
    %c0_8 = arith.constant 0 : index
    %c383 = arith.constant 383 : index
    %14 = vector.load %arg2[%c0_8, %c383] : memref<32x384xf32, #tpu.memory_space<vmem>>, vector<1x1xf32>
    %15 = vector.broadcast %13 : vector<32x1xf32> to vector<32x8xf32>
    %16 = arith.mulf %12, %15 : vector<32x8xf32>
    %cst_9 = arith.constant dense<0.000000e+00> : vector<8xf32>
    %17 = vector.multi_reduction <add>, %16, %cst_9 [0] : vector<32x8xf32> to vector<8xf32>
    %18 = vector.shape_cast %17 : vector<8xf32> to vector<1x8xf32>
    %19 = vector.broadcast %14 : vector<1x1xf32> to vector<1x8xf32>
    %20 = arith.addf %18, %19 : vector<1x8xf32>
    %c0_10 = arith.constant 0 : index
    %c0_11 = arith.constant 0 : index
    %21 = vector.load %arg3[%c0_10, %c0_11] : memref<1x8xf32, #tpu.memory_space<vmem>>, vector<1x8xf32>
    tpu.vector_store %arg3[%c0_10, %c0_11], %20 {strides = array<i32>} : memref<1x8xf32, #tpu.memory_space<vmem>>, vector<1x8xf32>,
    return
  }
  func.func @transform_0(%arg0: i32) -> (i32, i32) {
    %c0_i32 = arith.constant 0 : i32
    %c0_i32_0 = arith.constant 0 : i32
    return %arg0, %c0_i32 : i32, i32
  }
  func.func @transform_1(%arg0: i32) -> (i32, i32) {
    %c0_i32 = arith.constant 0 : i32
    %c0_i32_0 = arith.constant 0 : i32
    %c0_i32_1 = arith.constant 0 : i32
    return %c0_i32, %c0_i32_0 : i32, i32
  }
  func.func @transform_2(%arg0: i32) -> (i32, i32) {
    %c0_i32 = arith.constant 0 : i32
    %c0_i32_0 = arith.constant 0 : i32
    return %c0_i32, %arg0 : i32, i32
  }
}

</mosaic_0001>

<llo_original>
// kernel: tpu_custom_call.1
$region0: #{tpu_custom_call.1}
  #allocation0 [shape = 'u32[]', space=smem, size = 0x4, offset = 0x4, fixed_abs, tag = 'smem constant byte address 0x4 - core index']
  #allocation1 [shape = 'u32[144,128]{1,0:T(1,128)}', space=vmem, size = 0x12000, scoped, tag = 'internal scratch']
  %s0 = inlined_call_operand.vmem [shape: f32[8,4], index: 0, kind: input, shape index: {}]
  %s1 = inlined_call_operand.hbm [shape: f32[32,384], index: 1, kind: input, shape index: {}]
  %s2 = inlined_call_operand.hbm [shape: f32[1,8], index: 2, kind: output, shape index: {}]
  %s3 = sld [smem:[#allocation0]]
  $region22: #{tpu_custom_call.1} parent=0
    _
  %s5 = ssub.s32 1, %s3
  %s6 = scalar_select 0, %s5, %s3
  $region1: #{tpu_custom_call.1} parent=0
    #allocation2 [shape = 'u8[49152]{0}', space=vmem, size = 0xc000, scoped, tag = 'input window, operand 1, single buffered']
    #allocation3 [shape = 's32[1]{0}', space=sflag, size = 0x4, scoped, tag = 'scoped memory for tpu_custom_call.1']
    #allocation4 [shape = 's32[1]{0}', space=sflag, size = 0x4, scoped, tag = 'scoped memory for tpu_custom_call.1']
    #allocation5 [shape = 'u8[512]{0}', space=vmem, size = 0x400, scoped, tag = 'output window, operand 0, single buffered']
    %7 = vsyncpa [#allocation3], 0
    %8 = vsyncpa [#allocation4], 0
    // Predicated region
    $region2: #{tpu_custom_call.1} parent=1 // pred_check
      _
    $region3: #{tpu_custom_call.1} parent=1 // pred_check_branch
      %10 = sbr.rel (0) target = $region5
    $region4: #{tpu_custom_call.1} parent=1 // pred_region
      _
    $region5: #{tpu_custom_call.1} parent=1 // pred_fallthru
      _
    // Predicated region
    $region6: #{tpu_custom_call.1} parent=1 // pred_check
      _
    $region7: #{tpu_custom_call.1} parent=1 // pred_check_branch
      %12 = sbr.rel (0) target = $region9
    $region8: #{tpu_custom_call.1} parent=1 // pred_region
      %s14 = ssub.s32 1536, 1536
      %15 = vsyncadd [#allocation3], %s14
      %s16 = sshll.u32 [#allocation2], 4
      %s17 = int_to_ptr.vmem [resolvable:$true] %s16
      %22 = dma.hbm_to_vmem [thread:$0]  %s1, 1536, %s17, [#allocation3], 384, 384, 24
    $region9: #{tpu_custom_call.1} parent=1 // pred_fallthru
      _
    // Predicated region
    $region10: #{tpu_custom_call.1} parent=1 // pred_check
      _
    $region11: #{tpu_custom_call.1} parent=1 // pred_check_branch
      %24 = sbr.rel (0) target = $region13
    $region12: #{tpu_custom_call.1} parent=1 // pred_region
      %25 = dma.done [#allocation3], 1536
    $region13: #{tpu_custom_call.1} parent=1 // pred_fallthru
      _
    %v26 = vld [vmem:[#allocation2] sm:$0xff]
    %v27 = vld [vmem:[#allocation2 + $0x18] sm:$0xff]
    %v28 = vld [vmem:[#allocation2 + $0x30] sm:$0xff]
    %v29 = vld [vmem:[#allocation2 + $0x48] sm:$0xff]
    %v30 = vld [vmem:[%s0] sm:$0xff]
    %32 = vset.pattern.permute.xlu0 127
    %33 = vperm.xlu0 %32, %v26
    %v34 = vpop.permute.xlu0 %33
    %37 = vset.pattern.permute.xlu0 127
    %38 = vperm.xlu0 %37, %v27
    %v39 = vpop.permute.xlu0 %38
    %42 = vset.pattern.permute.xlu0 127
    %43 = vperm.xlu0 %42, %v28
    %v44 = vpop.permute.xlu0 %43
    %47 = vset.pattern.permute.xlu0 127
    %48 = vperm.xlu0 %47, %v29
    %v49 = vpop.permute.xlu0 %48
    %vm51 = vcmask 31744
    %v52 = vsel %vm51, %v26, 0
    %v54 = vsel %vm51, %v27, 0
    %v56 = vsel %vm51, %v28, 0
    %v58 = vsel %vm51, %v29, 0
    %v61 = vsel %vm51, %v30, 0
    %63 = vmatprep.subr.mxu0 0.0
    %v64 = vand.u32 %v61, 4294901760
    %65 = vmatpush1.xpose.msra.mxu0 %v64
    %66 = vmatprep.subr.mxu0 0.0
    %67 = vmatpush1.xpose.msra.mxu0 0.0
    %68 = vmatprep.subr.mxu0 0.0
    %69 = vmatpush1.xpose.msra.mxu0 0.0
    %70 = vmatprep.subr.mxu0 0.0
    %71 = vmatpush1.xpose.msra.mxu0 0.0
    %72 = vmatprep.subr.mxu0 0.0
    %73 = vmatpush1.xpose.msra.mxu0 0.0
    %74 = vmatprep.subr.mxu0 0.0
    %75 = vmatpush1.xpose.msra.mxu0 0.0
    %76 = vmatprep.subr.mxu0 0.0
    %77 = vmatpush1.xpose.msra.mxu0 0.0
    %78 = vmatprep.subr.mxu0 0.0
    %79 = vmatpush1.xpose.msra.mxu0 0.0
    %80 = vmatprep.subr.mxu0 0.0
    %81 = vmatpush1.xpose.msra.mxu0 0.0
    %82 = vmatprep.subr.mxu0 0.0
    %83 = vmatpush1.xpose.msra.mxu0 0.0
    %84 = vmatprep.subr.mxu0 0.0
    %85 = vmatpush1.xpose.msra.mxu0 0.0
    %86 = vmatprep.subr.mxu0 0.0
    %87 = vmatpush1.xpose.msra.mxu0 0.0
    %88 = vmatprep.subr.mxu0 0.0
    %89 = vmatpush1.xpose.msra.mxu0 0.0
    %90 = vmatprep.subr.mxu0 0.0
    %91 = vmatpush1.xpose.msra.mxu0 0.0
    %92 = vmatprep.subr.mxu0 0.0
    %93 = vmatpush1.xpose.msra.mxu0 0.0
    %94 = vmatprep.subr.mxu0 0.0
    %95 = vmatpush1.xpose.msra.mxu0 0.0
    %96 = vmatprep.subr.mxu0 0.0
    %97 = vmatpush1.xpose.msra.mxu0 0.0
    %98 = vmatprep.subr.mxu0 0.0
    %99 = vmatpush1.xpose.msra.mxu0 0.0
    %100 = vmatprep.subr.mxu0 0.0
    %101 = vmatpush1.xpose.msra.mxu0 0.0
    %102 = vmatprep.subr.mxu0 0.0
    %103 = vmatpush1.xpose.msra.mxu0 0.0
    %104 = vmatprep.subr.mxu0 0.0
    %105 = vmatpush1.xpose.msra.mxu0 0.0
    %106 = vmatprep.subr.mxu0 0.0
    %107 = vmatpush1.xpose.msra.mxu0 0.0
    %108 = vmatprep.subr.mxu0 0.0
    %109 = vmatpush1.xpose.msra.mxu0 0.0
    %110 = vmatprep.subr.mxu0 0.0
    %111 = vmatpush1.xpose.msra.mxu0 0.0
    %112 = vmatprep.subr.mxu0 0.0
    %113 = vmatpush1.xpose.msra.mxu0 0.0
    %114 = vmatprep.subr.mxu0 0.0
    %115 = vmatpush1.xpose.msra.mxu0 0.0
    %116 = vmatprep.subr.mxu0 0.0
    %117 = vmatpush1.xpose.msra.mxu0 0.0
    %118 = vmatprep.subr.mxu0 0.0
    %119 = vmatpush1.xpose.msra.mxu0 0.0
    %120 = vmatprep.subr.mxu0 0.0
    %121 = vmatpush1.xpose.msra.mxu0 0.0
    %122 = vmatprep.subr.mxu0 0.0
    %123 = vmatpush1.xpose.msra.mxu0 0.0
    %124 = vmatprep.subr.mxu0 0.0
    %125 = vmatpush1.xpose.msra.mxu0 0.0
    %126 = vmatprep.subr.mxu0 0.0
    %127 = vmatpush1.xpose.msra.mxu0 0.0
    %128 = vmatprep.mubr.f32.mxu0 0.0
    %v129 = vand.u32 %v52, 4294901760
    %v130 = vsub.f32 %v52, %v129
    %v131 = vand.u32 %v130, 4294901760
    %v132 = vsub.f32 %v130, %v131
    %v133 = vand.u32 %v132, 4294901760
    %134 = vmatmul.mubr.f32.gmra.mrb[0].mxu0 %v133
    %v135 = vpop.f32.mrb[0].mxu0
    %v136 = vadd.f32 %v34, %v135
    %v137 = vpop.f32.mrb[0].mxu0
    %138 = vmatprep.mubr.f32.mxu0 0.0
    %v139 = vand.u32 %v54, 4294901760
    %v140 = vsub.f32 %v54, %v139
    %v141 = vand.u32 %v140, 4294901760
    %v142 = vsub.f32 %v140, %v141
    %v143 = vand.u32 %v142, 4294901760
    %144 = vmatmul.mubr.f32.gmra.mrb[0].mxu0 %v143
    %v145 = vpop.f32.mrb[0].mxu0
    %v146 = vadd.f32 %v39, %v145
    %v147 = vpop.f32.mrb[0].mxu0
    %148 = vmatprep.mubr.f32.mxu0 0.0
    %v149 = vand.u32 %v56, 4294901760
    %v150 = vsub.f32 %v56, %v149
    %v151 = vand.u32 %v150, 4294901760
    %v152 = vsub.f32 %v150, %v151
    %v153 = vand.u32 %v152, 4294901760
    %154 = vmatmul.mubr.f32.gmra.mrb[0].mxu0 %v153
    %v155 = vpop.f32.mrb[0].mxu0
    %v156 = vadd.f32 %v44, %v155
    %v157 = vpop.f32.mrb[0].mxu0
    %158 = vmatprep.mubr.f32.mxu0 0.0
    %v159 = vand.u32 %v58, 4294901760
    %v160 = vsub.f32 %v58, %v159
    %v161 = vand.u32 %v160, 4294901760
    %v162 = vsub.f32 %v160, %v161
    %v163 = vand.u32 %v162, 4294901760
    %164 = vmatmul.mubr.f32.gmra.mrb[0].mxu0 %v163
    %v165 = vpop.f32.mrb[0].mxu0
    %v166 = vadd.f32 %v49, %v165
    %v167 = vpop.f32.mrb[0].mxu0
    %168 = vdwg.mxu0
    %169 = vmatprep.subr.mxu0 0.0
    %v170 = vand.u32 %v61, 4294901760
    %v171 = vsub.f32 %v61, %v170
    %v172 = vand.u32 %v171, 4294901760
    %v173 = vsub.f32 %v171, %v172
    %v174 = vand.u32 %v173, 4294901760
    %175 = vmatpush1.xpose.msra.mxu0 %v174
    %176 = vmatprep.subr.mxu0 0.0
    %177 = vmatpush1.xpose.msra.mxu0 0.0
    %178 = vmatprep.subr.mxu0 0.0
    %179 = vmatpush1.xpose.msra.mxu0 0.0
    %180 = vmatprep.subr.mxu0 0.0
    %181 = vmatpush1.xpose.msra.mxu0 0.0
    %182 = vmatprep.subr.mxu0 0.0
    %183 = vmatpush1.xpose.msra.mxu0 0.0
    %184 = vmatprep.subr.mxu0 0.0
    %185 = vmatpush1.xpose.msra.mxu0 0.0
    %186 = vmatprep.subr.mxu0 0.0
    %187 = vmatpush1.xpose.msra.mxu0 0.0
    %188 = vmatprep.subr.mxu0 0.0
    %189 = vmatpush1.xpose.msra.mxu0 0.0
    %190 = vmatprep.subr.mxu0 0.0
    %191 = vmatpush1.xpose.msra.mxu0 0.0
    %192 = vmatprep.subr.mxu0 0.0
    %193 = vmatpush1.xpose.msra.mxu0 0.0
    %194 = vmatprep.subr.mxu0 0.0
    %195 = vmatpush1.xpose.msra.mxu0 0.0
    %196 = vmatprep.subr.mxu0 0.0
    %197 = vmatpush1.xpose.msra.mxu0 0.0
    %198 = vmatprep.subr.mxu0 0.0
    %199 = vmatpush1.xpose.msra.mxu0 0.0
    %200 = vmatprep.subr.mxu0 0.0
    %201 = vmatpush1.xpose.msra.mxu0 0.0
    %202 = vmatprep.subr.mxu0 0.0
    %203 = vmatpush1.xpose.msra.mxu0 0.0
    %204 = vmatprep.subr.mxu0 0.0
    %205 = vmatpush1.xpose.msra.mxu0 0.0
    %206 = vmatprep.subr.mxu0 0.0
    %207 = vmatpush1.xpose.msra.mxu0 0.0
    %208 = vmatprep.subr.mxu0 0.0
    %209 = vmatpush1.xpose.msra.mxu0 0.0
    %210 = vmatprep.subr.mxu0 0.0
    %211 = vmatpush1.xpose.msra.mxu0 0.0
    %212 = vmatprep.subr.mxu0 0.0
    %213 = vmatpush1.xpose.msra.mxu0 0.0
    %214 = vmatprep.subr.mxu0 0.0
    %215 = vmatpush1.xpose.msra.mxu0 0.0
    %216 = vmatprep.subr.mxu0 0.0
    %217 = vmatpush1.xpose.msra.mxu0 0.0
    %218 = vmatprep.subr.mxu0 0.0
    %219 = vmatpush1.xpose.msra.mxu0 0.0
    %220 = vmatprep.subr.mxu0 0.0
    %221 = vmatpush1.xpose.msra.mxu0 0.0
    %222 = vmatprep.subr.mxu0 0.0
    %223 = vmatpush1.xpose.msra.mxu0 0.0
    %224 = vmatprep.subr.mxu0 0.0
    %225 = vmatpush1.xpose.msra.mxu0 0.0
    %226 = vmatprep.subr.mxu0 0.0
    %227 = vmatpush1.xpose.msra.mxu0 0.0
    %228 = vmatprep.subr.mxu0 0.0
    %229 = vmatpush1.xpose.msra.mxu0 0.0
    %230 = vmatprep.subr.mxu0 0.0
    %231 = vmatpush1.xpose.msra.mxu0 0.0
    %232 = vmatprep.subr.mxu0 0.0
    %233 = vmatpush1.xpose.msra.mxu0 0.0
    %234 = vmatprep.subr.mxu0 0.0
    %235 = vmatpush1.xpose.msra.mxu0 0.0
    %236 = vmatprep.subr.mxu0 0.0
    %237 = vmatpush1.xpose.msra.mxu0 0.0
    %238 = vmatprep.mubr.f32.mxu0 0.0
    %v239 = vand.u32 %v52, 4294901760
    %240 = vmatmul.mubr.f32.gmra.mrb[0].mxu0 %v239
    %v241 = vpop.f32.mrb[0].mxu0
    %v242 = vadd.f32 %v136, %v241
    %v243 = vpop.f32.mrb[0].mxu0
    %244 = vmatprep.mubr.f32.mxu0 0.0
    %v245 = vand.u32 %v54, 4294901760
    %246 = vmatmul.mubr.f32.gmra.mrb[0].mxu0 %v245
    %v247 = vpop.f32.mrb[0].mxu0
    %v248 = vadd.f32 %v146, %v247
    %v249 = vpop.f32.mrb[0].mxu0
    %250 = vmatprep.mubr.f32.mxu0 0.0
    %v251 = vand.u32 %v56, 4294901760
    %252 = vmatmul.mubr.f32.gmra.mrb[0].mxu0 %v251
    %v253 = vpop.f32.mrb[0].mxu0
    %v254 = vadd.f32 %v156, %v253
    %v255 = vpop.f32.mrb[0].mxu0
    %256 = vmatprep.mubr.f32.mxu0 0.0
    %v257 = vand.u32 %v58, 4294901760
    %258 = vmatmul.mubr.f32.gmra.mrb[0].mxu0 %v257
    %v259 = vpop.f32.mrb[0].mxu0
    %v260 = vadd.f32 %v166, %v259
    %v261 = vpop.f32.mrb[0].mxu0
    %262 = vdwg.mxu0
    %263 = vmatprep.subr.mxu0 0.0
    %v264 = vand.u32 %v61, 4294901760
    %v265 = vsub.f32 %v61, %v264
    %266 = vmatpush1.xpose.msra.mxu0 %v265
    %267 = vmatprep.subr.mxu0 0.0
    %268 = vmatpush1.xpose.msra.mxu0 0.0
    %269 = vmatprep.subr.mxu0 0.0
    %270 = vmatpush1.xpose.msra.mxu0 0.0
    %271 = vmatprep.subr.mxu0 0.0
    %272 = vmatpush1.xpose.msra.mxu0 0.0
    %273 = vmatprep.subr.mxu0 0.0
    %274 = vmatpush1.xpose.msra.mxu0 0.0
    %275 = vmatprep.subr.mxu0 0.0
    %276 = vmatpush1.xpose.msra.mxu0 0.0
    %277 = vmatprep.subr.mxu0 0.0
    %278 = vmatpush1.xpose.msra.mxu0 0.0
    %279 = vmatprep.subr.mxu0 0.0
    %280 = vmatpush1.xpose.msra.mxu0 0.0
    %281 = vmatprep.subr.mxu0 0.0
    %282 = vmatpush1.xpose.msra.mxu0 0.0
    %283 = vmatprep.subr.mxu0 0.0
    %284 = vmatpush1.xpose.msra.mxu0 0.0
    %285 = vmatprep.subr.mxu0 0.0
    %286 = vmatpush1.xpose.msra.mxu0 0.0
    %287 = vmatprep.subr.mxu0 0.0
    %288 = vmatpush1.xpose.msra.mxu0 0.0
    %289 = vmatprep.subr.mxu0 0.0
    %290 = vmatpush1.xpose.msra.mxu0 0.0
    %291 = vmatprep.subr.mxu0 0.0
    %292 = vmatpush1.xpose.msra.mxu0 0.0
    %293 = vmatprep.subr.mxu0 0.0
    %294 = vmatpush1.xpose.msra.mxu0 0.0
    %295 = vmatprep.subr.mxu0 0.0
    %296 = vmatpush1.xpose.msra.mxu0 0.0
    %297 = vmatprep.subr.mxu0 0.0
    %298 = vmatpush1.xpose.msra.mxu0 0.0
    %299 = vmatprep.subr.mxu0 0.0
    %300 = vmatpush1.xpose.msra.mxu0 0.0
    %301 = vmatprep.subr.mxu0 0.0
    %302 = vmatpush1.xpose.msra.mxu0 0.0
    %303 = vmatprep.subr.mxu0 0.0
    %304 = vmatpush1.xpose.msra.mxu0 0.0
    %305 = vmatprep.subr.mxu0 0.0
    %306 = vmatpush1.xpose.msra.mxu0 0.0
    %307 = vmatprep.subr.mxu0 0.0
    %308 = vmatpush1.xpose.msra.mxu0 0.0
    %309 = vmatprep.subr.mxu0 0.0
    %310 = vmatpush1.xpose.msra.mxu0 0.0
    %311 = vmatprep.subr.mxu0 0.0
    %312 = vmatpush1.xpose.msra.mxu0 0.0
    %313 = vmatprep.subr.mxu0 0.0
    %314 = vmatpush1.xpose.msra.mxu0 0.0
    %315 = vmatprep.subr.mxu0 0.0
    %316 = vmatpush1.xpose.msra.mxu0 0.0
    %317 = vmatprep.subr.mxu0 0.0
    %318 = vmatpush1.xpose.msra.mxu0 0.0
    %319 = vmatprep.subr.mxu0 0.0
    %320 = vmatpush1.xpose.msra.mxu0 0.0
    %321 = vmatprep.subr.mxu0 0.0
    %322 = vmatpush1.xpose.msra.mxu0 0.0
    %323 = vmatprep.subr.mxu0 0.0
    %324 = vmatpush1.xpose.msra.mxu0 0.0
    %325 = vmatprep.subr.mxu0 0.0
    %326 = vmatpush1.xpose.msra.mxu0 0.0
    %327 = vmatprep.subr.mxu0 0.0
    %328 = vmatpush1.xpose.msra.mxu0 0.0
    %329 = vmatprep.mubr.f32.mxu0 0.0
    %v330 = vand.u32 %v52, 4294901760
    %v331 = vsub.f32 %v52, %v330
    %332 = vmatmul.mubr.f32.gmra.mrb[0].mxu0 %v331
    %v333 = vpop.f32.mrb[0].mxu0
    %v334 = vadd.f32 %v242, %v333
    %v335 = vpop.f32.mrb[0].mxu0
    %336 = vmatprep.mubr.f32.mxu0 0.0
    %v337 = vand.u32 %v54, 4294901760
    %v338 = vsub.f32 %v54, %v337
    %339 = vmatmul.mubr.f32.gmra.mrb[0].mxu0 %v338
    %v340 = vpop.f32.mrb[0].mxu0
    %v341 = vadd.f32 %v248, %v340
    %v342 = vpop.f32.mrb[0].mxu0
    %343 = vmatprep.mubr.f32.mxu0 0.0
    %v344 = vand.u32 %v56, 4294901760
    %v345 = vsub.f32 %v56, %v344
    %346 = vmatmul.mubr.f32.gmra.mrb[0].mxu0 %v345
    %v347 = vpop.f32.mrb[0].mxu0
    %v348 = vadd.f32 %v254, %v347
    %v349 = vpop.f32.mrb[0].mxu0
    %350 = vmatprep.mubr.f32.mxu0 0.0
    %v351 = vand.u32 %v58, 4294901760
    %v352 = vsub.f32 %v58, %v351
    %353 = vmatmul.mubr.f32.gmra.mrb[0].mxu0 %v352
    %v354 = vpop.f32.mrb[0].mxu0
    %v355 = vadd.f32 %v260, %v354
    %v356 = vpop.f32.mrb[0].mxu0
    %357 = vdwg.mxu0
    %358 = vmatprep.subr.mxu0 0.0
    %v359 = vand.u32 %v61, 4294901760
    %360 = vmatpush1.xpose.msra.mxu0 %v359
    %361 = vmatprep.subr.mxu0 0.0
    %362 = vmatpush1.xpose.msra.mxu0 0.0
    %363 = vmatprep.subr.mxu0 0.0
    %364 = vmatpush1.xpose.msra.mxu0 0.0
    %365 = vmatprep.subr.mxu0 0.0
    %366 = vmatpush1.xpose.msra.mxu0 0.0
    %367 = vmatprep.subr.mxu0 0.0
    %368 = vmatpush1.xpose.msra.mxu0 0.0
    %369 = vmatprep.subr.mxu0 0.0
    %370 = vmatpush1.xpose.msra.mxu0 0.0
    %371 = vmatprep.subr.mxu0 0.0
    %372 = vmatpush1.xpose.msra.mxu0 0.0
    %373 = vmatprep.subr.mxu0 0.0
    %374 = vmatpush1.xpose.msra.mxu0 0.0
    %375 = vmatprep.subr.mxu0 0.0
    %376 = vmatpush1.xpose.msra.mxu0 0.0
    %377 = vmatprep.subr.mxu0 0.0
    %378 = vmatpush1.xpose.msra.mxu0 0.0
    %379 = vmatprep.subr.mxu0 0.0
    %380 = vmatpush1.xpose.msra.mxu0 0.0
    %381 = vmatprep.subr.mxu0 0.0
    %382 = vmatpush1.xpose.msra.mxu0 0.0
    %383 = vmatprep.subr.mxu0 0.0
    %384 = vmatpush1.xpose.msra.mxu0 0.0
    %385 = vmatprep.subr.mxu0 0.0
    %386 = vmatpush1.xpose.msra.mxu0 0.0
    %387 = vmatprep.subr.mxu0 0.0
    %388 = vmatpush1.xpose.msra.mxu0 0.0
    %389 = vmatprep.subr.mxu0 0.0
    %390 = vmatpush1.xpose.msra.mxu0 0.0
    %391 = vmatprep.subr.mxu0 0.0
    %392 = vmatpush1.xpose.msra.mxu0 0.0
    %393 = vmatprep.subr.mxu0 0.0
    %394 = vmatpush1.xpose.msra.mxu0 0.0
    %395 = vmatprep.subr.mxu0 0.0
    %396 = vmatpush1.xpose.msra.mxu0 0.0
    %397 = vmatprep.subr.mxu0 0.0
    %398 = vmatpush1.xpose.msra.mxu0 0.0
    %399 = vmatprep.subr.mxu0 0.0
    %400 = vmatpush1.xpose.msra.mxu0 0.0
    %401 = vmatprep.subr.mxu0 0.0
    %402 = vmatpush1.xpose.msra.mxu0 0.0
    %403 = vmatprep.subr.mxu0 0.0
    %404 = vmatpush1.xpose.msra.mxu0 0.0
    %405 = vmatprep.subr.mxu0 0.0
    %406 = vmatpush1.xpose.msra.mxu0 0.0
    %407 = vmatprep.subr.mxu0 0.0
    %408 = vmatpush1.xpose.msra.mxu0 0.0
    %409 = vmatprep.subr.mxu0 0.0
    %410 = vmatpush1.xpose.msra.mxu0 0.0
    %411 = vmatprep.subr.mxu0 0.0
    %412 = vmatpush1.xpose.msra.mxu0 0.0
    %413 = vmatprep.subr.mxu0 0.0
    %414 = vmatpush1.xpose.msra.mxu0 0.0
    %415 = vmatprep.subr.mxu0 0.0
    %416 = vmatpush1.xpose.msra.mxu0 0.0
    %417 = vmatprep.subr.mxu0 0.0
    %418 = vmatpush1.xpose.msra.mxu0 0.0
    %419 = vmatprep.subr.mxu0 0.0
    %420 = vmatpush1.xpose.msra.mxu0 0.0
    %421 = vmatprep.subr.mxu0 0.0
    %422 = vmatpush1.xpose.msra.mxu0 0.0
    %423 = vmatprep.mubr.f32.mxu0 0.0
    %v424 = vand.u32 %v52, 4294901760
    %v425 = vsub.f32 %v52, %v424
    %v426 = vand.u32 %v425, 4294901760
    %427 = vmatmul.mubr.f32.gmra.mrb[0].mxu0 %v426
    %v428 = vpop.f32.mrb[0].mxu0
    %v429 = vadd.f32 %v334, %v428
    %v430 = vpop.f32.mrb[0].mxu0
    %431 = vmatprep.mubr.f32.mxu0 0.0
    %v432 = vand.u32 %v54, 4294901760
    %v433 = vsub.f32 %v54, %v432
    %v434 = vand.u32 %v433, 4294901760
    %435 = vmatmul.mubr.f32.gmra.mrb[0].mxu0 %v434
    %v436 = vpop.f32.mrb[0].mxu0
    %v437 = vadd.f32 %v341, %v436
    %v438 = vpop.f32.mrb[0].mxu0
    %439 = vmatprep.mubr.f32.mxu0 0.0
    %v440 = vand.u32 %v56, 4294901760
    %v441 = vsub.f32 %v56, %v440
    %v442 = vand.u32 %v441, 4294901760
    %443 = vmatmul.mubr.f32.gmra.mrb[0].mxu0 %v442
    %v444 = vpop.f32.mrb[0].mxu0
    %v445 = vadd.f32 %v348, %v444
    %v446 = vpop.f32.mrb[0].mxu0
    %447 = vmatprep.mubr.f32.mxu0 0.0
    %v448 = vand.u32 %v58, 4294901760
    %v449 = vsub.f32 %v58, %v448
    %v450 = vand.u32 %v449, 4294901760
    %451 = vmatmul.mubr.f32.gmra.mrb[0].mxu0 %v450
    %v452 = vpop.f32.mrb[0].mxu0
    %v453 = vadd.f32 %v355, %v452
    %v454 = vpop.f32.mrb[0].mxu0
    %455 = vdwg.mxu0
    %456 = vmatprep.subr.mxu0 0.0
    %v457 = vand.u32 %v61, 4294901760
    %v458 = vsub.f32 %v61, %v457
    %v459 = vand.u32 %v458, 4294901760
    %460 = vmatpush1.xpose.msra.mxu0 %v459
    %461 = vmatprep.subr.mxu0 0.0
    %462 = vmatpush1.xpose.msra.mxu0 0.0
    %463 = vmatprep.subr.mxu0 0.0
    %464 = vmatpush1.xpose.msra.mxu0 0.0
    %465 = vmatprep.subr.mxu0 0.0
    %466 = vmatpush1.xpose.msra.mxu0 0.0
    %467 = vmatprep.subr.mxu0 0.0
    %468 = vmatpush1.xpose.msra.mxu0 0.0
    %469 = vmatprep.subr.mxu0 0.0
    %470 = vmatpush1.xpose.msra.mxu0 0.0
    %471 = vmatprep.subr.mxu0 0.0
    %472 = vmatpush1.xpose.msra.mxu0 0.0
    %473 = vmatprep.subr.mxu0 0.0
    %474 = vmatpush1.xpose.msra.mxu0 0.0
    %475 = vmatprep.subr.mxu0 0.0
    %476 = vmatpush1.xpose.msra.mxu0 0.0
    %477 = vmatprep.subr.mxu0 0.0
    %478 = vmatpush1.xpose.msra.mxu0 0.0
    %479 = vmatprep.subr.mxu0 0.0
    %480 = vmatpush1.xpose.msra.mxu0 0.0
    %481 = vmatprep.subr.mxu0 0.0
    %482 = vmatpush1.xpose.msra.mxu0 0.0
    %483 = vmatprep.subr.mxu0 0.0
    %484 = vmatpush1.xpose.msra.mxu0 0.0
    %485 = vmatprep.subr.mxu0 0.0
    %486 = vmatpush1.xpose.msra.mxu0 0.0
    %487 = vmatprep.subr.mxu0 0.0
    %488 = vmatpush1.xpose.msra.mxu0 0.0
    %489 = vmatprep.subr.mxu0 0.0
    %490 = vmatpush1.xpose.msra.mxu0 0.0
    %491 = vmatprep.subr.mxu0 0.0
    %492 = vmatpush1.xpose.msra.mxu0 0.0
    %493 = vmatprep.subr.mxu0 0.0
    %494 = vmatpush1.xpose.msra.mxu0 0.0
    %495 = vmatprep.subr.mxu0 0.0
    %496 = vmatpush1.xpose.msra.mxu0 0.0
    %497 = vmatprep.subr.mxu0 0.0
    %498 = vmatpush1.xpose.msra.mxu0 0.0
    %499 = vmatprep.subr.mxu0 0.0
    %500 = vmatpush1.xpose.msra.mxu0 0.0
    %501 = vmatprep.subr.mxu0 0.0
    %502 = vmatpush1.xpose.msra.mxu0 0.0
    %503 = vmatprep.subr.mxu0 0.0
    %504 = vmatpush1.xpose.msra.mxu0 0.0
    %505 = vmatprep.subr.mxu0 0.0
    %506 = vmatpush1.xpose.msra.mxu0 0.0
    %507 = vmatprep.subr.mxu0 0.0
    %508 = vmatpush1.xpose.msra.mxu0 0.0
    %509 = vmatprep.subr.mxu0 0.0
    %510 = vmatpush1.xpose.msra.mxu0 0.0
    %511 = vmatprep.subr.mxu0 0.0
    %512 = vmatpush1.xpose.msra.mxu0 0.0
    %513 = vmatprep.subr.mxu0 0.0
    %514 = vmatpush1.xpose.msra.mxu0 0.0
    %515 = vmatprep.subr.mxu0 0.0
    %516 = vmatpush1.xpose.msra.mxu0 0.0
    %517 = vmatprep.subr.mxu0 0.0
    %518 = vmatpush1.xpose.msra.mxu0 0.0
    %519 = vmatprep.subr.mxu0 0.0
    %520 = vmatpush1.xpose.msra.mxu0 0.0
    %521 = vmatprep.subr.mxu0 0.0
    %522 = vmatpush1.xpose.msra.mxu0 0.0
    %523 = vmatprep.mubr.f32.mxu0 0.0
    %v524 = vand.u32 %v52, 4294901760
    %525 = vmatmul.mubr.f32.gmra.mrb[0].mxu0 %v524
    %v526 = vpop.f32.mrb[0].mxu0
    %v527 = vadd.f32 %v429, %v526
    %v528 = vpop.f32.mrb[0].mxu0
    %529 = vmatprep.mubr.f32.mxu0 0.0
    %v530 = vand.u32 %v54, 4294901760
    %531 = vmatmul.mubr.f32.gmra.mrb[0].mxu0 %v530
    %v532 = vpop.f32.mrb[0].mxu0
    %v533 = vadd.f32 %v437, %v532
    %v534 = vpop.f32.mrb[0].mxu0
    %535 = vmatprep.mubr.f32.mxu0 0.0
    %v536 = vand.u32 %v56, 4294901760
    %537 = vmatmul.mubr.f32.gmra.mrb[0].mxu0 %v536
    %v538 = vpop.f32.mrb[0].mxu0
    %v539 = vadd.f32 %v445, %v538
    %v540 = vpop.f32.mrb[0].mxu0
    %541 = vmatprep.mubr.f32.mxu0 0.0
    %v542 = vand.u32 %v58, 4294901760
    %543 = vmatmul.mubr.f32.gmra.mrb[0].mxu0 %v542
    %v544 = vpop.f32.mrb[0].mxu0
    %v545 = vadd.f32 %v453, %v544
    %v546 = vpop.f32.mrb[0].mxu0
    %547 = vdwg.mxu0
    %548 = vmatprep.subr.mxu0 0.0
    %v549 = vand.u32 %v61, 4294901760
    %550 = vmatpush1.xpose.msra.mxu0 %v549
    %551 = vmatprep.subr.mxu0 0.0
    %552 = vmatpush1.xpose.msra.mxu0 0.0
    %553 = vmatprep.subr.mxu0 0.0
    %554 = vmatpush1.xpose.msra.mxu0 0.0
    %555 = vmatprep.subr.mxu0 0.0
    %556 = vmatpush1.xpose.msra.mxu0 0.0
    %557 = vmatprep.subr.mxu0 0.0
    %558 = vmatpush1.xpose.msra.mxu0 0.0
    %559 = vmatprep.subr.mxu0 0.0
    %560 = vmatpush1.xpose.msra.mxu0 0.0
    %561 = vmatprep.subr.mxu0 0.0
    %562 = vmatpush1.xpose.msra.mxu0 0.0
    %563 = vmatprep.subr.mxu0 0.0
    %564 = vmatpush1.xpose.msra.mxu0 0.0
    %565 = vmatprep.subr.mxu0 0.0
    %566 = vmatpush1.xpose.msra.mxu0 0.0
    %567 = vmatprep.subr.mxu0 0.0
    %568 = vmatpush1.xpose.msra.mxu0 0.0
    %569 = vmatprep.subr.mxu0 0.0
    %570 = vmatpush1.xpose.msra.mxu0 0.0
    %571 = vmatprep.subr.mxu0 0.0
    %572 = vmatpush1.xpose.msra.mxu0 0.0
    %573 = vmatprep.subr.mxu0 0.0
    %574 = vmatpush1.xpose.msra.mxu0 0.0
    %575 = vmatprep.subr.mxu0 0.0
    %576 = vmatpush1.xpose.msra.mxu0 0.0
    %577 = vmatprep.subr.mxu0 0.0
    %578 = vmatpush1.xpose.msra.mxu0 0.0
    %579 = vmatprep.subr.mxu0 0.0
    %580 = vmatpush1.xpose.msra.mxu0 0.0
    %581 = vmatprep.subr.mxu0 0.0
    %582 = vmatpush1.xpose.msra.mxu0 0.0
    %583 = vmatprep.subr.mxu0 0.0
    %584 = vmatpush1.xpose.msra.mxu0 0.0
    %585 = vmatprep.subr.mxu0 0.0
    %586 = vmatpush1.xpose.msra.mxu0 0.0
    %587 = vmatprep.subr.mxu0 0.0
    %588 = vmatpush1.xpose.msra.mxu0 0.0
    %589 = vmatprep.subr.mxu0 0.0
    %590 = vmatpush1.xpose.msra.mxu0 0.0
    %591 = vmatprep.subr.mxu0 0.0
    %592 = vmatpush1.xpose.msra.mxu0 0.0
    %593 = vmatprep.subr.mxu0 0.0
    %594 = vmatpush1.xpose.msra.mxu0 0.0
    %595 = vmatprep.subr.mxu0 0.0
    %596 = vmatpush1.xpose.msra.mxu0 0.0
    %597 = vmatprep.subr.mxu0 0.0
    %598 = vmatpush1.xpose.msra.mxu0 0.0
    %599 = vmatprep.subr.mxu0 0.0
    %600 = vmatpush1.xpose.msra.mxu0 0.0
    %601 = vmatprep.subr.mxu0 0.0
    %602 = vmatpush1.xpose.msra.mxu0 0.0
    %603 = vmatprep.subr.mxu0 0.0
    %604 = vmatpush1.xpose.msra.mxu0 0.0
    %605 = vmatprep.subr.mxu0 0.0
    %606 = vmatpush1.xpose.msra.mxu0 0.0
    %607 = vmatprep.subr.mxu0 0.0
    %608 = vmatpush1.xpose.msra.mxu0 0.0
    %609 = vmatprep.subr.mxu0 0.0
    %610 = vmatpush1.xpose.msra.mxu0 0.0
    %611 = vmatprep.subr.mxu0 0.0
    %612 = vmatpush1.xpose.msra.mxu0 0.0
    %613 = vmatprep.mubr.f32.mxu0 0.0
    %v614 = vand.u32 %v52, 4294901760
    %615 = vmatmul.mubr.f32.gmra.mrb[0].mxu0 %v614
    %v616 = vpop.f32.mrb[0].mxu0
    %v617 = vadd.f32 %v527, %v616
    %v618 = vpop.f32.mrb[0].mxu0
    %619 = vmatprep.mubr.f32.mxu0 0.0
    %v620 = vand.u32 %v54, 4294901760
    %621 = vmatmul.mubr.f32.gmra.mrb[0].mxu0 %v620
    %v622 = vpop.f32.mrb[0].mxu0
    %v623 = vadd.f32 %v533, %v622
    %v624 = vpop.f32.mrb[0].mxu0
    %625 = vmatprep.mubr.f32.mxu0 0.0
    %v626 = vand.u32 %v56, 4294901760
    %627 = vmatmul.mubr.f32.gmra.mrb[0].mxu0 %v626
    %v628 = vpop.f32.mrb[0].mxu0
    %v629 = vadd.f32 %v539, %v628
    %v630 = vpop.f32.mrb[0].mxu0
    %631 = vmatprep.mubr.f32.mxu0 0.0
    %v632 = vand.u32 %v58, 4294901760
    %633 = vmatmul.mubr.f32.gmra.mrb[0].mxu0 %v632
    %v634 = vpop.f32.mrb[0].mxu0
    %v635 = vadd.f32 %v545, %v634
    %v636 = vpop.f32.mrb[0].mxu0
    %637 = vdwg.mxu0
    %v638 = vtanh.pop %v617
    %v639 = vtanh.pop %v623
    %v640 = vtanh.pop %v629
    %v641 = vtanh.pop %v635
    %v642 = vld [vmem:[#allocation2 + $0x8] sm:$0xff]
    %v643 = vld [vmem:[#allocation2 + $0x20] sm:$0xff]
    %v644 = vld [vmem:[#allocation2 + $0x38] sm:$0xff]
    %v645 = vld [vmem:[#allocation2 + $0x50] sm:$0xff]
    %647 = vset.pattern.permute.xlu0 127
    %648 = vperm.xlu0 %647, %v642
    %v649 = vpop.permute.xlu0 %648
    %652 = vset.pattern.permute.xlu0 127
    %653 = vperm.xlu0 %652, %v643
    %v654 = vpop.permute.xlu0 %653
    %657 = vset.pattern.permute.xlu0 127
    %658 = vperm.xlu0 %657, %v644
    %v659 = vpop.permute.xlu0 %658
    %662 = vset.pattern.permute.xlu0 127
    %663 = vperm.xlu0 %662, %v645
    %v664 = vpop.permute.xlu0 %663
    %vm666 = vcmask 261120
    %v667 = vsel %vm666, %v642, 0
    %v669 = vsel %vm666, %v643, 0
    %v671 = vsel %vm666, %v644, 0
    %v673 = vsel %vm666, %v645, 0
    %675 = vmatprep.subr.mxu0 0.0
    %v676 = vand.u32 %v638, 4294901760
    %677 = vmatpush1.msra.mxu0 %v676
    %678 = vmatprep.subr.mxu0 0.0
    %v679 = vand.u32 %v639, 4294901760
    %680 = vmatpush1.msra.mxu0 %v679
    %681 = vmatprep.subr.mxu0 0.0
    %v682 = vand.u32 %v640, 4294901760
    %683 = vmatpush1.msra.mxu0 %v682
    %684 = vmatprep.subr.mxu0 0.0
    %v685 = vand.u32 %v641, 4294901760
    %686 = vmatpush1.msra.mxu0 %v685
    %687 = vmatprep.subr.mxu0 0.0
    %688 = vmatpush1.msra.mxu0 0.0
    %689 = vmatprep.subr.mxu0 0.0
    %690 = vmatpush1.msra.mxu0 0.0
    %691 = vmatprep.subr.mxu0 0.0
    %692 = vmatpush1.msra.mxu0 0.0
    %693 = vmatprep.subr.mxu0 0.0
    %694 = vmatpush1.msra.mxu0 0.0
    %695 = vmatprep.subr.mxu0 0.0
    %696 = vmatpush1.msra.mxu0 0.0
    %697 = vmatprep.subr.mxu0 0.0
    %698 = vmatpush1.msra.mxu0 0.0
    %699 = vmatprep.subr.mxu0 0.0
    %700 = vmatpush1.msra.mxu0 0.0
    %701 = vmatprep.subr.mxu0 0.0
    %702 = vmatpush1.msra.mxu0 0.0
    %703 = vmatprep.subr.mxu0 0.0
    %704 = vmatpush1.msra.mxu0 0.0
    %705 = vmatprep.subr.mxu0 0.0
    %706 = vmatpush1.msra.mxu0 0.0
    %707 = vmatprep.subr.mxu0 0.0
    %708 = vmatpush1.msra.mxu0 0.0
    %709 = vmatprep.subr.mxu0 0.0
    %710 = vmatpush1.msra.mxu0 0.0
    %711 = vmatprep.subr.mxu0 0.0
    %712 = vmatpush1.msra.mxu0 0.0
    %713 = vmatprep.subr.mxu0 0.0
    %714 = vmatpush1.msra.mxu0 0.0
    %715 = vmatprep.subr.mxu0 0.0
    %716 = vmatpush1.msra.mxu0 0.0
    %717 = vmatprep.subr.mxu0 0.0
    %718 = vmatpush1.msra.mxu0 0.0
    %719 = vmatprep.subr.mxu0 0.0
    %720 = vmatpush1.msra.mxu0 0.0
    %721 = vmatprep.subr.mxu0 0.0
    %722 = vmatpush1.msra.mxu0 0.0
    %723 = vmatprep.subr.mxu0 0.0
    %724 = vmatpush1.msra.mxu0 0.0
    %725 = vmatprep.subr.mxu0 0.0
    %726 = vmatpush1.msra.mxu0 0.0
    %727 = vmatprep.subr.mxu0 0.0
    %728 = vmatpush1.msra.mxu0 0.0
    %729 = vmatprep.subr.mxu0 0.0
    %730 = vmatpush1.msra.mxu0 0.0
    %731 = vmatprep.subr.mxu0 0.0
    %732 = vmatpush1.msra.mxu0 0.0
    %733 = vmatprep.subr.mxu0 0.0
    %734 = vmatpush1.msra.mxu0 0.0
    %735 = vmatprep.subr.mxu0 0.0
    %736 = vmatpush1.msra.mxu0 0.0
    %737 = vmatprep.subr.mxu0 0.0
    %738 = vmatpush1.msra.mxu0 0.0
    %739 = vmatprep.subr.mxu0 0.0
    %740 = vmatpush1.msra.mxu0 0.0
    %741 = vmatprep.subr.mxu0 0.0
    %742 = vmatpush1.msra.mxu0 0.0
    %743 = vmatprep.mubr.f32.mxu0 0.0
    %v744 = vand.u32 %v667, 4294901760
    %v745 = vsub.f32 %v667, %v744
    %v746 = vand.u32 %v745, 4294901760
    %v747 = vsub.f32 %v745, %v746
    %v748 = vand.u32 %v747, 4294901760
    %749 = vmatmul.mubr.f32.gmra.mrb[0].mxu0 %v748
    %v750 = vpop.f32.mrb[0].mxu0
    %v751 = vadd.f32 %v649, %v750
    %v752 = vpop.f32.mrb[0].mxu0
    %753 = vmatprep.mubr.f32.mxu0 0.0
    %v754 = vand.u32 %v669, 4294901760
    %v755 = vsub.f32 %v669, %v754
    %v756 = vand.u32 %v755, 4294901760
    %v757 = vsub.f32 %v755, %v756
    %v758 = vand.u32 %v757, 4294901760
    %759 = vmatmul.mubr.f32.gmra.mrb[0].mxu0 %v758
    %v760 = vpop.f32.mrb[0].mxu0
    %v761 = vadd.f32 %v654, %v760
    %v762 = vpop.f32.mrb[0].mxu0
    %763 = vmatprep.mubr.f32.mxu0 0.0
    %v764 = vand.u32 %v671, 4294901760
    %v765 = vsub.f32 %v671, %v764
    %v766 = vand.u32 %v765, 4294901760
    %v767 = vsub.f32 %v765, %v766
    %v768 = vand.u32 %v767, 4294901760
    %769 = vmatmul.mubr.f32.gmra.mrb[0].mxu0 %v768
    %v770 = vpop.f32.mrb[0].mxu0
    %v771 = vadd.f32 %v659, %v770
    %v772 = vpop.f32.mrb[0].mxu0
    %773 = vmatprep.mubr.f32.mxu0 0.0
    %v774 = vand.u32 %v673, 4294901760
    %v775 = vsub.f32 %v673, %v774
    %v776 = vand.u32 %v775, 4294901760
    %v777 = vsub.f32 %v775, %v776
    %v778 = vand.u32 %v777, 4294901760
    %779 = vmatmul.mubr.f32.gmra.mrb[0].mxu0 %v778
    %v780 = vpop.f32.mrb[0].mxu0
    %v781 = vadd.f32 %v664, %v780
    %v782 = vpop.f32.mrb[0].mxu0
    %783 = vdwg.mxu0
    %784 = vmatprep.subr.mxu0 0.0
    %v785 = vand.u32 %v638, 4294901760
    %v786 = vsub.f32 %v638, %v785
    %v787 = vand.u32 %v786, 4294901760
    %v788 = vsub.f32 %v786, %v787
    %v789 = vand.u32 %v788, 4294901760
    %790 = vmatpush1.msra.mxu0 %v789
    %791 = vmatprep.subr.mxu0 0.0
    %v792 = vand.u32 %v639, 4294901760
    %v793 = vsub.f32 %v639, %v792
    %v794 = vand.u32 %v793, 4294901760
    %v795 = vsub.f32 %v793, %v794
    %v796 = vand.u32 %v795, 4294901760
    %797 = vmatpush1.msra.mxu0 %v796
    %798 = vmatprep.subr.mxu0 0.0
    %v799 = vand.u32 %v640, 4294901760
    %v800 = vsub.f32 %v640, %v799
    %v801 = vand.u32 %v800, 4294901760
    %v802 = vsub.f32 %v800, %v801
    %v803 = vand.u32 %v802, 4294901760
    %804 = vmatpush1.msra.mxu0 %v803
    %805 = vmatprep.subr.mxu0 0.0
    %v806 = vand.u32 %v641, 4294901760
    %v807 = vsub.f32 %v641, %v806
    %v808 = vand.u32 %v807, 4294901760
    %v809 = vsub.f32 %v807, %v808
    %v810 = vand.u32 %v809, 4294901760
    %811 = vmatpush1.msra.mxu0 %v810
    %812 = vmatprep.subr.mxu0 0.0
    %813 = vmatpush1.msra.mxu0 0.0
    %814 = vmatprep.subr.mxu0 0.0
    %815 = vmatpush1.msra.mxu0 0.0
    %816 = vmatprep.subr.mxu0 0.0
    %817 = vmatpush1.msra.mxu0 0.0
    %818 = vmatprep.subr.mxu0 0.0
    %819 = vmatpush1.msra.mxu0 0.0
    %820 = vmatprep.subr.mxu0 0.0
    %821 = vmatpush1.msra.mxu0 0.0
    %822 = vmatprep.subr.mxu0 0.0
    %823 = vmatpush1.msra.mxu0 0.0
    %824 = vmatprep.subr.mxu0 0.0
    %825 = vmatpush1.msra.mxu0 0.0
    %826 = vmatprep.subr.mxu0 0.0
    %827 = vmatpush1.msra.mxu0 0.0
    %828 = vmatprep.subr.mxu0 0.0
    %829 = vmatpush1.msra.mxu0 0.0
    %830 = vmatprep.subr.mxu0 0.0
    %831 = vmatpush1.msra.mxu0 0.0
    %832 = vmatprep.subr.mxu0 0.0
    %833 = vmatpush1.msra.mxu0 0.0
    %834 = vmatprep.subr.mxu0 0.0
    %835 = vmatpush1.msra.mxu0 0.0
    %836 = vmatprep.subr.mxu0 0.0
    %837 = vmatpush1.msra.mxu0 0.0
    %838 = vmatprep.subr.mxu0 0.0
    %839 = vmatpush1.msra.mxu0 0.0
    %840 = vmatprep.subr.mxu0 0.0
    %841 = vmatpush1.msra.mxu0 0.0
    %842 = vmatprep.subr.mxu0 0.0
    %843 = vmatpush1.msra.mxu0 0.0
    %844 = vmatprep.subr.mxu0 0.0
    %845 = vmatpush1.msra.mxu0 0.0
    %846 = vmatprep.subr.mxu0 0.0
    %847 = vmatpush1.msra.mxu0 0.0
    %848 = vmatprep.subr.mxu0 0.0
    %849 = vmatpush1.msra.mxu0 0.0
    %850 = vmatprep.subr.mxu0 0.0
    %851 = vmatpush1.msra.mxu0 0.0
    %852 = vmatprep.subr.mxu0 0.0
    %853 = vmatpush1.msra.mxu0 0.0
    %854 = vmatprep.subr.mxu0 0.0
    %855 = vmatpush1.msra.mxu0 0.0
    %856 = vmatprep.subr.mxu0 0.0
    %857 = vmatpush1.msra.mxu0 0.0
    %858 = vmatprep.subr.mxu0 0.0
    %859 = vmatpush1.msra.mxu0 0.0
    %860 = vmatprep.subr.mxu0 0.0
    %861 = vmatpush1.msra.mxu0 0.0
    %862 = vmatprep.subr.mxu0 0.0
    %863 = vmatpush1.msra.mxu0 0.0
    %864 = vmatprep.subr.mxu0 0.0
    %865 = vmatpush1.msra.mxu0 0.0
    %866 = vmatprep.subr.mxu0 0.0
    %867 = vmatpush1.msra.mxu0 0.0
    %868 = vmatprep.mubr.f32.mxu0 0.0
    %v869 = vand.u32 %v667, 4294901760
    %870 = vmatmul.mubr.f32.gmra.mrb[0].mxu0 %v869
    %v871 = vpop.f32.mrb[0].mxu0
    %v872 = vadd.f32 %v751, %v871
    %v873 = vpop.f32.mrb[0].mxu0
    %874 = vmatprep.mubr.f32.mxu0 0.0
    %v875 = vand.u32 %v669, 4294901760
    %876 = vmatmul.mubr.f32.gmra.mrb[0].mxu0 %v875
    %v877 = vpop.f32.mrb[0].mxu0
    %v878 = vadd.f32 %v761, %v877
    %v879 = vpop.f32.mrb[0].mxu0
    %880 = vmatprep.mubr.f32.mxu0 0.0
    %v881 = vand.u32 %v671, 4294901760
    %882 = vmatmul.mubr.f32.gmra.mrb[0].mxu0 %v881
    %v883 = vpop.f32.mrb[0].mxu0
    %v884 = vadd.f32 %v771, %v883
    %v885 = vpop.f32.mrb[0].mxu0
    %886 = vmatprep.mubr.f32.mxu0 0.0
    %v887 = vand.u32 %v673, 4294901760
    %888 = vmatmul.mubr.f32.gmra.mrb[0].mxu0 %v887
    %v889 = vpop.f32.mrb[0].mxu0
    %v890 = vadd.f32 %v781, %v889
    %v891 = vpop.f32.mrb[0].mxu0
    %892 = vdwg.mxu0
    %893 = vmatprep.subr.mxu0 0.0
    %v894 = vand.u32 %v638, 4294901760
    %v895 = vsub.f32 %v638, %v894
    %896 = vmatpush1.msra.mxu0 %v895
    %897 = vmatprep.subr.mxu0 0.0
    %v898 = vand.u32 %v639, 4294901760
    %v899 = vsub.f32 %v639, %v898
    %900 = vmatpush1.msra.mxu0 %v899
    %901 = vmatprep.subr.mxu0 0.0
    %v902 = vand.u32 %v640, 4294901760
    %v903 = vsub.f32 %v640, %v902
    %904 = vmatpush1.msra.mxu0 %v903
    %905 = vmatprep.subr.mxu0 0.0
    %v906 = vand.u32 %v641, 4294901760
    %v907 = vsub.f32 %v641, %v906
    %908 = vmatpush1.msra.mxu0 %v907
    %909 = vmatprep.subr.mxu0 0.0
    %910 = vmatpush1.msra.mxu0 0.0
    %911 = vmatprep.subr.mxu0 0.0
    %912 = vmatpush1.msra.mxu0 0.0
    %913 = vmatprep.subr.mxu0 0.0
    %914 = vmatpush1.msra.mxu0 0.0
    %915 = vmatprep.subr.mxu0 0.0
    %916 = vmatpush1.msra.mxu0 0.0
    %917 = vmatprep.subr.mxu0 0.0
    %918 = vmatpush1.msra.mxu0 0.0
    %919 = vmatprep.subr.mxu0 0.0
    %920 = vmatpush1.msra.mxu0 0.0
    %921 = vmatprep.subr.mxu0 0.0
    %922 = vmatpush1.msra.mxu0 0.0
    %923 = vmatprep.subr.mxu0 0.0
    %924 = vmatpush1.msra.mxu0 0.0
    %925 = vmatprep.subr.mxu0 0.0
    %926 = vmatpush1.msra.mxu0 0.0
    %927 = vmatprep.subr.mxu0 0.0
    %928 = vmatpush1.msra.mxu0 0.0
    %929 = vmatprep.subr.mxu0 0.0
    %930 = vmatpush1.msra.mxu0 0.0
    %931 = vmatprep.subr.mxu0 0.0
    %932 = vmatpush1.msra.mxu0 0.0
    %933 = vmatprep.subr.mxu0 0.0
    %934 = vmatpush1.msra.mxu0 0.0
    %935 = vmatprep.subr.mxu0 0.0
    %936 = vmatpush1.msra.mxu0 0.0
    %937 = vmatprep.subr.mxu0 0.0
    %938 = vmatpush1.msra.mxu0 0.0
    %939 = vmatprep.subr.mxu0 0.0
    %940 = vmatpush1.msra.mxu0 0.0
    %941 = vmatprep.subr.mxu0 0.0
    %942 = vmatpush1.msra.mxu0 0.0
    %943 = vmatprep.subr.mxu0 0.0
    %944 = vmatpush1.msra.mxu0 0.0
    %945 = vmatprep.subr.mxu0 0.0
    %946 = vmatpush1.msra.mxu0 0.0
    %947 = vmatprep.subr.mxu0 0.0
    %948 = vmatpush1.msra.mxu0 0.0
    %949 = vmatprep.subr.mxu0 0.0
    %950 = vmatpush1.msra.mxu0 0.0
    %951 = vmatprep.subr.mxu0 0.0
    %952 = vmatpush1.msra.mxu0 0.0
    %953 = vmatprep.subr.mxu0 0.0
    %954 = vmatpush1.msra.mxu0 0.0
    %955 = vmatprep.subr.mxu0 0.0
    %956 = vmatpush1.msra.mxu0 0.0
    %957 = vmatprep.subr.mxu0 0.0
    %958 = vmatpush1.msra.mxu0 0.0
    %959 = vmatprep.subr.mxu0 0.0
    %960 = vmatpush1.msra.mxu0 0.0
    %961 = vmatprep.subr.mxu0 0.0
    %962 = vmatpush1.msra.mxu0 0.0
    %963 = vmatprep.subr.mxu0 0.0
    %964 = vmatpush1.msra.mxu0 0.0
    %965 = vmatprep.mubr.f32.mxu0 0.0
    %v966 = vand.u32 %v667, 4294901760
    %v967 = vsub.f32 %v667, %v966
    %968 = vmatmul.mubr.f32.gmra.mrb[0].mxu0 %v967
    %v969 = vpop.f32.mrb[0].mxu0
    %v970 = vadd.f32 %v872, %v969
    %v971 = vpop.f32.mrb[0].mxu0
    %972 = vmatprep.mubr.f32.mxu0 0.0
    %v973 = vand.u32 %v669, 4294901760
    %v974 = vsub.f32 %v669, %v973
    %975 = vmatmul.mubr.f32.gmra.mrb[0].mxu0 %v974
    %v976 = vpop.f32.mrb[0].mxu0
    %v977 = vadd.f32 %v878, %v976
    %v978 = vpop.f32.mrb[0].mxu0
    %979 = vmatprep.mubr.f32.mxu0 0.0
    %v980 = vand.u32 %v671, 4294901760
    %v981 = vsub.f32 %v671, %v980
    %982 = vmatmul.mubr.f32.gmra.mrb[0].mxu0 %v981
    %v983 = vpop.f32.mrb[0].mxu0
    %v984 = vadd.f32 %v884, %v983
    %v985 = vpop.f32.mrb[0].mxu0
    %986 = vmatprep.mubr.f32.mxu0 0.0
    %v987 = vand.u32 %v673, 4294901760
    %v988 = vsub.f32 %v673, %v987
    %989 = vmatmul.mubr.f32.gmra.mrb[0].mxu0 %v988
    %v990 = vpop.f32.mrb[0].mxu0
    %v991 = vadd.f32 %v890, %v990
    %v992 = vpop.f32.mrb[0].mxu0
    %993 = vdwg.mxu0
    %994 = vmatprep.subr.mxu0 0.0
    %v995 = vand.u32 %v638, 4294901760
    %996 = vmatpush1.msra.mxu0 %v995
    %997 = vmatprep.subr.mxu0 0.0
    %v998 = vand.u32 %v639, 4294901760
    %999 = vmatpush1.msra.mxu0 %v998
    %1000 = vmatprep.subr.mxu0 0.0
    %v1001 = vand.u32 %v640, 4294901760
    %1002 = vmatpush1.msra.mxu0 %v1001
    %1003 = vmatprep.subr.mxu0 0.0
    %v1004 = vand.u32 %v641, 4294901760
    %1005 = vmatpush1.msra.mxu0 %v1004
    %1006 = vmatprep.subr.mxu0 0.0
    %1007 = vmatpush1.msra.mxu0 0.0
    %1008 = vmatprep.subr.mxu0 0.0
    %1009 = vmatpush1.msra.mxu0 0.0
    %1010 = vmatprep.subr.mxu0 0.0
    %1011 = vmatpush1.msra.mxu0 0.0
    %1012 = vmatprep.subr.mxu0 0.0
    %1013 = vmatpush1.msra.mxu0 0.0
    %1014 = vmatprep.subr.mxu0 0.0
    %1015 = vmatpush1.msra.mxu0 0.0
    %1016 = vmatprep.subr.mxu0 0.0
    %1017 = vmatpush1.msra.mxu0 0.0
    %1018 = vmatprep.subr.mxu0 0.0
    %1019 = vmatpush1.msra.mxu0 0.0
    %1020 = vmatprep.subr.mxu0 0.0
    %1021 = vmatpush1.msra.mxu0 0.0
    %1022 = vmatprep.subr.mxu0 0.0
    %1023 = vmatpush1.msra.mxu0 0.0
    %1024 = vmatprep.subr.mxu0 0.0
    %1025 = vmatpush1.msra.mxu0 0.0
    %1026 = vmatprep.subr.mxu0 0.0
    %1027 = vmatpush1.msra.mxu0 0.0
    %1028 = vmatprep.subr.mxu0 0.0
    %1029 = vmatpush1.msra.mxu0 0.0
    %1030 = vmatprep.subr.mxu0 0.0
    %1031 = vmatpush1.msra.mxu0 0.0
    %1032 = vmatprep.subr.mxu0 0.0
    %1033 = vmatpush1.msra.mxu0 0.0
    %1034 = vmatprep.subr.mxu0 0.0
    %1035 = vmatpush1.msra.mxu0 0.0
    %1036 = vmatprep.subr.mxu0 0.0
    %1037 = vmatpush1.msra.mxu0 0.0
    %1038 = vmatprep.subr.mxu0 0.0
    %1039 = vmatpush1.msra.mxu0 0.0
    %1040 = vmatprep.subr.mxu0 0.0
    %1041 = vmatpush1.msra.mxu0 0.0
    %1042 = vmatprep.subr.mxu0 0.0
    %1043 = vmatpush1.msra.mxu0 0.0
    %1044 = vmatprep.subr.mxu0 0.0
    %1045 = vmatpush1.msra.mxu0 0.0
    %1046 = vmatprep.subr.mxu0 0.0
    %1047 = vmatpush1.msra.mxu0 0.0
    %1048 = vmatprep.subr.mxu0 0.0
    %1049 = vmatpush1.msra.mxu0 0.0
    %1050 = vmatprep.subr.mxu0 0.0
    %1051 = vmatpush1.msra.mxu0 0.0
    %1052 = vmatprep.subr.mxu0 0.0
    %1053 = vmatpush1.msra.mxu0 0.0
    %1054 = vmatprep.subr.mxu0 0.0
    %1055 = vmatpush1.msra.mxu0 0.0
    %1056 = vmatprep.subr.mxu0 0.0
    %1057 = vmatpush1.msra.mxu0 0.0
    %1058 = vmatprep.subr.mxu0 0.0
    %1059 = vmatpush1.msra.mxu0 0.0
    %1060 = vmatprep.subr.mxu0 0.0
    %1061 = vmatpush1.msra.mxu0 0.0
    %1062 = vmatprep.mubr.f32.mxu0 0.0
    %v1063 = vand.u32 %v667, 4294901760
    %v1064 = vsub.f32 %v667, %v1063
    %v1065 = vand.u32 %v1064, 4294901760
    %1066 = vmatmul.mubr.f32.gmra.mrb[0].mxu0 %v1065
    %v1067 = vpop.f32.mrb[0].mxu0
    %v1068 = vadd.f32 %v970, %v1067
    %v1069 = vpop.f32.mrb[0].mxu0
    %1070 = vmatprep.mubr.f32.mxu0 0.0
    %v1071 = vand.u32 %v669, 4294901760
    %v1072 = vsub.f32 %v669, %v1071
    %v1073 = vand.u32 %v1072, 4294901760
    %1074 = vmatmul.mubr.f32.gmra.mrb[0].mxu0 %v1073
    %v1075 = vpop.f32.mrb[0].mxu0
    %v1076 = vadd.f32 %v977, %v1075
    %v1077 = vpop.f32.mrb[0].mxu0
    %1078 = vmatprep.mubr.f32.mxu0 0.0
    %v1079 = vand.u32 %v671, 4294901760
    %v1080 = vsub.f32 %v671, %v1079
    %v1081 = vand.u32 %v1080, 4294901760
    %1082 = vmatmul.mubr.f32.gmra.mrb[0].mxu0 %v1081
    %v1083 = vpop.f32.mrb[0].mxu0
    %v1084 = vadd.f32 %v984, %v1083
    %v1085 = vpop.f32.mrb[0].mxu0
    %1086 = vmatprep.mubr.f32.mxu0 0.0
    %v1087 = vand.u32 %v673, 4294901760
    %v1088 = vsub.f32 %v673, %v1087
    %v1089 = vand.u32 %v1088, 4294901760
    %1090 = vmatmul.mubr.f32.gmra.mrb[0].mxu0 %v1089
    %v1091 = vpop.f32.mrb[0].mxu0
    %v1092 = vadd.f32 %v991, %v1091
    %v1093 = vpop.f32.mrb[0].mxu0
    %1094 = vdwg.mxu0
    %1095 = vmatprep.subr.mxu0 0.0
    %v1096 = vand.u32 %v638, 4294901760
    %v1097 = vsub.f32 %v638, %v1096
    %v1098 = vand.u32 %v1097, 4294901760
    %1099 = vmatpush1.msra.mxu0 %v1098
    %1100 = vmatprep.subr.mxu0 0.0
    %v1101 = vand.u32 %v639, 4294901760
    %v1102 = vsub.f32 %v639, %v1101
    %v1103 = vand.u32 %v1102, 4294901760
    %1104 = vmatpush1.msra.mxu0 %v1103
    %1105 = vmatprep.subr.mxu0 0.0
    %v1106 = vand.u32 %v640, 4294901760
    %v1107 = vsub.f32 %v640, %v1106
    %v1108 = vand.u32 %v1107, 4294901760
    %1109 = vmatpush1.msra.mxu0 %v1108
    %1110 = vmatprep.subr.mxu0 0.0
    %v1111 = vand.u32 %v641, 4294901760
    %v1112 = vsub.f32 %v641, %v1111
    %v1113 = vand.u32 %v1112, 4294901760
    %1114 = vmatpush1.msra.mxu0 %v1113
    %1115 = vmatprep.subr.mxu0 0.0
    %1116 = vmatpush1.msra.mxu0 0.0
    %1117 = vmatprep.subr.mxu0 0.0
    %1118 = vmatpush1.msra.mxu0 0.0
    %1119 = vmatprep.subr.mxu0 0.0
    %1120 = vmatpush1.msra.mxu0 0.0
    %1121 = vmatprep.subr.mxu0 0.0
    %1122 = vmatpush1.msra.mxu0 0.0
    %1123 = vmatprep.subr.mxu0 0.0
    %1124 = vmatpush1.msra.mxu0 0.0
    %1125 = vmatprep.subr.mxu0 0.0
    %1126 = vmatpush1.msra.mxu0 0.0
    %1127 = vmatprep.subr.mxu0 0.0
    %1128 = vmatpush1.msra.mxu0 0.0
    %1129 = vmatprep.subr.mxu0 0.0
    %1130 = vmatpush1.msra.mxu0 0.0
    %1131 = vmatprep.subr.mxu0 0.0
    %1132 = vmatpush1.msra.mxu0 0.0
    %1133 = vmatprep.subr.mxu0 0.0
    %1134 = vmatpush1.msra.mxu0 0.0
    %1135 = vmatprep.subr.mxu0 0.0
    %1136 = vmatpush1.msra.mxu0 0.0
    %1137 = vmatprep.subr.mxu0 0.0
    %1138 = vmatpush1.msra.mxu0 0.0
    %1139 = vmatprep.subr.mxu0 0.0
    %1140 = vmatpush1.msra.mxu0 0.0
    %1141 = vmatprep.subr.mxu0 0.0
    %1142 = vmatpush1.msra.mxu0 0.0
    %1143 = vmatprep.subr.mxu0 0.0
    %1144 = vmatpush1.msra.mxu0 0.0
    %1145 = vmatprep.subr.mxu0 0.0
    %1146 = vmatpush1.msra.mxu0 0.0
    %1147 = vmatprep.subr.mxu0 0.0
    %1148 = vmatpush1.msra.mxu0 0.0
    %1149 = vmatprep.subr.mxu0 0.0
    %1150 = vmatpush1.msra.mxu0 0.0
    %1151 = vmatprep.subr.mxu0 0.0
    %1152 = vmatpush1.msra.mxu0 0.0
    %1153 = vmatprep.subr.mxu0 0.0
    %1154 = vmatpush1.msra.mxu0 0.0
    %1155 = vmatprep.subr.mxu0 0.0
    %1156 = vmatpush1.msra.mxu0 0.0
    %1157 = vmatprep.subr.mxu0 0.0
    %1158 = vmatpush1.msra.mxu0 0.0
    %1159 = vmatprep.subr.mxu0 0.0
    %1160 = vmatpush1.msra.mxu0 0.0
    %1161 = vmatprep.subr.mxu0 0.0
    %1162 = vmatpush1.msra.mxu0 0.0
    %1163 = vmatprep.subr.mxu0 0.0
    %1164 = vmatpush1.msra.mxu0 0.0
    %1165 = vmatprep.subr.mxu0 0.0
    %1166 = vmatpush1.msra.mxu0 0.0
    %1167 = vmatprep.subr.mxu0 0.0
    %1168 = vmatpush1.msra.mxu0 0.0
    %1169 = vmatprep.subr.mxu0 0.0
    %1170 = vmatpush1.msra.mxu0 0.0
    %1171 = vmatprep.mubr.f32.mxu0 0.0
    %v1172 = vand.u32 %v667, 4294901760
    %1173 = vmatmul.mubr.f32.gmra.mrb[0].mxu0 %v1172
    %v1174 = vpop.f32.mrb[0].mxu0
    %v1175 = vadd.f32 %v1068, %v1174
    %v1176 = vpop.f32.mrb[0].mxu0
    %1177 = vmatprep.mubr.f32.mxu0 0.0
    %v1178 = vand.u32 %v669, 4294901760
    %1179 = vmatmul.mubr.f32.gmra.mrb[0].mxu0 %v1178
    %v1180 = vpop.f32.mrb[0].mxu0
    %v1181 = vadd.f32 %v1076, %v1180
    %v1182 = vpop.f32.mrb[0].mxu0
    %1183 = vmatprep.mubr.f32.mxu0 0.0
    %v1184 = vand.u32 %v671, 4294901760
    %1185 = vmatmul.mubr.f32.gmra.mrb[0].mxu0 %v1184
    %v1186 = vpop.f32.mrb[0].mxu0
    %v1187 = vadd.f32 %v1084, %v1186
    %v1188 = vpop.f32.mrb[0].mxu0
    %1189 = vmatprep.mubr.f32.mxu0 0.0
    %v1190 = vand.u32 %v673, 4294901760
    %1191 = vmatmul.mubr.f32.gmra.mrb[0].mxu0 %v1190
    %v1192 = vpop.f32.mrb[0].mxu0
    %v1193 = vadd.f32 %v1092, %v1192
    %v1194 = vpop.f32.mrb[0].mxu0
    %1195 = vdwg.mxu0
    %1196 = vmatprep.subr.mxu0 0.0
    %v1197 = vand.u32 %v638, 4294901760
    %1198 = vmatpush1.msra.mxu0 %v1197
    %1199 = vmatprep.subr.mxu0 0.0
    %v1200 = vand.u32 %v639, 4294901760
    %1201 = vmatpush1.msra.mxu0 %v1200
    %1202 = vmatprep.subr.mxu0 0.0
    %v1203 = vand.u32 %v640, 4294901760
    %1204 = vmatpush1.msra.mxu0 %v1203
    %1205 = vmatprep.subr.mxu0 0.0
    %v1206 = vand.u32 %v641, 4294901760
    %1207 = vmatpush1.msra.mxu0 %v1206
    %1208 = vmatprep.subr.mxu0 0.0
    %1209 = vmatpush1.msra.mxu0 0.0
    %1210 = vmatprep.subr.mxu0 0.0
    %1211 = vmatpush1.msra.mxu0 0.0
    %1212 = vmatprep.subr.mxu0 0.0
    %1213 = vmatpush1.msra.mxu0 0.0
    %1214 = vmatprep.subr.mxu0 0.0
    %1215 = vmatpush1.msra.mxu0 0.0
    %1216 = vmatprep.subr.mxu0 0.0
    %1217 = vmatpush1.msra.mxu0 0.0
    %1218 = vmatprep.subr.mxu0 0.0
    %1219 = vmatpush1.msra.mxu0 0.0
    %1220 = vmatprep.subr.mxu0 0.0
    %1221 = vmatpush1.msra.mxu0 0.0
    %1222 = vmatprep.subr.mxu0 0.0
    %1223 = vmatpush1.msra.mxu0 0.0
    %1224 = vmatprep.subr.mxu0 0.0
    %1225 = vmatpush1.msra.mxu0 0.0
    %1226 = vmatprep.subr.mxu0 0.0
    %1227 = vmatpush1.msra.mxu0 0.0
    %1228 = vmatprep.subr.mxu0 0.0
    %1229 = vmatpush1.msra.mxu0 0.0
    %1230 = vmatprep.subr.mxu0 0.0
    %1231 = vmatpush1.msra.mxu0 0.0
    %1232 = vmatprep.subr.mxu0 0.0
    %1233 = vmatpush1.msra.mxu0 0.0
    %1234 = vmatprep.subr.mxu0 0.0
    %1235 = vmatpush1.msra.mxu0 0.0
    %1236 = vmatprep.subr.mxu0 0.0
    %1237 = vmatpush1.msra.mxu0 0.0
    %1238 = vmatprep.subr.mxu0 0.0
    %1239 = vmatpush1.msra.mxu0 0.0
    %1240 = vmatprep.subr.mxu0 0.0
    %1241 = vmatpush1.msra.mxu0 0.0
    %1242 = vmatprep.subr.mxu0 0.0
    %1243 = vmatpush1.msra.mxu0 0.0
    %1244 = vmatprep.subr.mxu0 0.0
    %1245 = vmatpush1.msra.mxu0 0.0
    %1246 = vmatprep.subr.mxu0 0.0
    %1247 = vmatpush1.msra.mxu0 0.0
    %1248 = vmatprep.subr.mxu0 0.0
    %1249 = vmatpush1.msra.mxu0 0.0
    %1250 = vmatprep.subr.mxu0 0.0
    %1251 = vmatpush1.msra.mxu0 0.0
    %1252 = vmatprep.subr.mxu0 0.0
    %1253 = vmatpush1.msra.mxu0 0.0
    %1254 = vmatprep.subr.mxu0 0.0
    %1255 = vmatpush1.msra.mxu0 0.0
    %1256 = vmatprep.subr.mxu0 0.0
    %1257 = vmatpush1.msra.mxu0 0.0
    %1258 = vmatprep.subr.mxu0 0.0
    %1259 = vmatpush1.msra.mxu0 0.0
    %1260 = vmatprep.subr.mxu0 0.0
    %1261 = vmatpush1.msra.mxu0 0.0
    %1262 = vmatprep.subr.mxu0 0.0
    %1263 = vmatpush1.msra.mxu0 0.0
    %1264 = vmatprep.mubr.f32.mxu0 0.0
    %v1265 = vand.u32 %v667, 4294901760
    %1266 = vmatmul.mubr.f32.gmra.mrb[0].mxu0 %v1265
    %v1267 = vpop.f32.mrb[0].mxu0
    %v1268 = vadd.f32 %v1175, %v1267
    %v1269 = vpop.f32.mrb[0].mxu0
    %1270 = vmatprep.mubr.f32.mxu0 0.0
    %v1271 = vand.u32 %v669, 4294901760
    %1272 = vmatmul.mubr.f32.gmra.mrb[0].mxu0 %v1271
    %v1273 = vpop.f32.mrb[0].mxu0
    %v1274 = vadd.f32 %v1181, %v1273
    %v1275 = vpop.f32.mrb[0].mxu0
    %1276 = vmatprep.mubr.f32.mxu0 0.0
    %v1277 = vand.u32 %v671, 4294901760
    %1278 = vmatmul.mubr.f32.gmra.mrb[0].mxu0 %v1277
    %v1279 = vpop.f32.mrb[0].mxu0
    %v1280 = vadd.f32 %v1187, %v1279
    %v1281 = vpop.f32.mrb[0].mxu0
    %1282 = vmatprep.mubr.f32.mxu0 0.0
    %v1283 = vand.u32 %v673, 4294901760
    %1284 = vmatmul.mubr.f32.gmra.mrb[0].mxu0 %v1283
    %v1285 = vpop.f32.mrb[0].mxu0
    %v1286 = vadd.f32 %v1193, %v1285
    %v1287 = vpop.f32.mrb[0].mxu0
    %1288 = vdwg.mxu0
    %v1289 = vtanh.pop %v1268
    %v1290 = vtanh.pop %v1274
    %v1291 = vtanh.pop %v1280
    %v1292 = vtanh.pop %v1286
    %v1293 = vld [vmem:[#allocation2 + $0x10] sm:$0xff]
    %v1294 = vld [vmem:[#allocation2 + $0x28] sm:$0xff]
    %v1295 = vld [vmem:[#allocation2 + $0x40] sm:$0xff]
    %v1296 = vld [vmem:[#allocation2 + $0x58] sm:$0xff]
    %v1297 = vld [vmem:[#allocation2 + $0x10] ss:$0 sm:$0xff]
    %1299 = vset.pattern.permute.xlu0 0
    %1300 = vperm.xlu0 %1299, %v1293
    %v1301 = vpop.permute.xlu0 %1300
    %1304 = vset.pattern.permute.xlu0 0
    %1305 = vperm.xlu0 %1304, %v1294
    %v1306 = vpop.permute.xlu0 %1305
    %1309 = vset.pattern.permute.xlu0 0
    %1310 = vperm.xlu0 %1309, %v1295
    %v1311 = vpop.permute.xlu0 %1310
    %1314 = vset.pattern.permute.xlu0 0
    %1315 = vperm.xlu0 %1314, %v1296
    %v1316 = vpop.permute.xlu0 %1315
    %v1318 = vmul.f32 %v1289, %v1301
    %v1319 = vmul.f32 %v1290, %v1306
    %v1320 = vmul.f32 %v1291, %v1311
    %v1321 = vmul.f32 %v1292, %v1316
    %vm1322 = vcmask 64512
    %v1323 = vsel %vm1322, %v1318, 0.0
    %v1324 = vsel %vm1322, %v1319, 0.0
    %v1325 = vadd.f32 %v1323, %v1324
    %v1326 = vsel %vm1322, %v1320, 0.0
    %v1327 = vadd.f32 %v1325, %v1326
    %v1328 = vsel %vm1322, %v1321, 0.0
    %v1329 = vadd.f32 %v1327, %v1328
    %v1330 = vrot.slane %v1329, 4
    %v1331 = vadd.f32 %v1329, %v1330
    %v1332 = vrot.slane %v1331, 2
    %v1333 = vadd.f32 %v1331, %v1332
    %v1334 = vrot.slane %v1333, 1
    %v1335 = vadd.f32 %v1333, %v1334
    %1337 = vset.pattern.permute.xlu0 127
    %1338 = vperm.xlu0 %1337, %v1297
    %v1339 = vpop.permute.xlu0 %1338
    %v1341 = vadd.f32 %v1335, %v1339
    %vm1342 = vcmask 57344
    %1343 = vst.msk [vmem:[#allocation5] sm:$0x1] %vm1342, %v1341
    // Predicated region
    $region14: #{tpu_custom_call.1} parent=1 // pred_check
      _
    $region15: #{tpu_custom_call.1} parent=1 // pred_check_branch
      %1345 = sbr.rel (0) target = $region17
    $region16: #{tpu_custom_call.1} parent=1 // pred_region
      %s1347 = ssub.s32 16, 16
      %1348 = vsyncadd [#allocation4], %s1347
      %s1350 = sshll.u32 [#allocation5], 4
      %s1351 = int_to_ptr.vmem [resolvable:$true] %s1350
      %1353 = dma.vmem_to_hbm [thread:$0]  %s1351, 16, %s2, [#allocation4]
    $region17: #{tpu_custom_call.1} parent=1 // pred_fallthru
      _
    // Predicated region
    $region18: #{tpu_custom_call.1} parent=1 // pred_check
      _
    $region19: #{tpu_custom_call.1} parent=1 // pred_check_branch
      %1355 = sbr.rel (0) target = $region21
    $region20: #{tpu_custom_call.1} parent=1 // pred_region
      %1356 = dma.done [#allocation4], 16
    $region21: #{tpu_custom_call.1} parent=1 // pred_fallthru
      _
    %1357 = vsyncpa [#allocation3], 1
    %1358 = vsyncpa [#allocation4], 1

</llo_original>
